<compile_context>
chip_gen: v5e
topology: v5e:2x2
jax: 0.10.0
libtpu: 0.0.40
codegen_flags: <defaults>
</compile_context>

<pallas_src>
import jax
import jax.numpy as jnp
from jax.experimental import pallas as pl
from jax.experimental.pallas import tpu as pltpu

IN_DIM, HID_DIM, OUT_DIM = 784, 200, 10
HID_PAD, OUT_PAD = 256, 128   # lane-padded feature dims (multiples of 128)
TM_MAX = 1024                 # max batch-tile rows


def _round_up(n, m):
    return ((n + m - 1) // m) * m


def _pad2d(a, rows, cols):
    r, c = a.shape
    return jnp.pad(a, ((0, rows - r), (0, cols - c)))


def mlp_kernel(x_ref, w1_ref, b1_ref, w2_ref, b2_ref, w3_ref, b3_ref, o_ref):
    # x streams in as f32 and is cast to bf16 on the VPU (hidden under MXU/DMA).
    x = x_ref[...].astype(jnp.bfloat16)
    # Layer 1: Linear(784, 200) + ReLU   (bf16 MXU matmul, f32 accumulate)
    h1 = jnp.dot(x, w1_ref[...], preferred_element_type=jnp.float32)
    h1 = jnp.maximum(h1 + b1_ref[...], 0.0).astype(jnp.bfloat16)
    # Layer 2: Linear(200, 200) + ReLU
    h2 = jnp.dot(h1, w2_ref[...], preferred_element_type=jnp.float32)
    h2 = jnp.maximum(h2 + b2_ref[...], 0.0).astype(jnp.bfloat16)
    # Layer 3: Linear(200, 10) + ReLU (matches the spec: ReLU after every Linear)
    h3 = jnp.dot(h2, w3_ref[...], preferred_element_type=jnp.float32)
    o_ref[...] = jnp.maximum(h3 + b3_ref[...], 0.0).astype(o_ref.dtype)


def prepare_params(w1, b1, w2, b2, w3, b3):
    """One-time weight prep (zero-pad output dims to 128 multiples + bf16 cast).

    Zero padding keeps padded lanes at exactly 0 through bias-add + ReLU, so they never
    contaminate later layers.  Layer-1 contraction dim stays 784 (unpadded).
    """
    w1p = _pad2d(w1, IN_DIM, HID_PAD).astype(jnp.bfloat16)
    w2p = _pad2d(w2, HID_PAD, HID_PAD).astype(jnp.bfloat16)
    w3p = _pad2d(w3, HID_PAD, OUT_PAD).astype(jnp.bfloat16)
    b1p = _pad2d(b1, 1, HID_PAD).astype(jnp.float32)
    b2p = _pad2d(b2, 1, HID_PAD).astype(jnp.float32)
    b3p = _pad2d(b3, 1, OUT_PAD).astype(jnp.float32)
    return w1p, b1p, w2p, b2p, w3p, b3p


def _choose_tile(batch):
    """Pick a batch tile: <= TM_MAX, multiple of 16, >=2 grid steps when B >= 32."""
    steps = -(-batch // TM_MAX)              # ceil(B / TM_MAX)
    if batch >= 32:
        steps = max(steps, 2)                # let the "parallel" axis use both v7x TCs
    tm = _round_up(-(-batch // steps), 16)   # bf16-friendly (16, 128) tiles
    return tm


@jax.jit
def mlp_forward(x, w1p, b1p, w2p, b2p, w3p, b3p):
    """x: (B, 784) float32 (unpadded). Params from prepare_params. Returns (B, 10) f32."""
    B = x.shape[0]
    tm = _choose_tile(B)
    grid = (pl.cdiv(B, tm),)                 # partial last block handled by Pallas masking

    const_map = lambda i: (0, 0)

    def resident_spec(shape):
        # Constant index_map -> block never changes; single buffer (no dead 2nd copy).
        return pl.BlockSpec(shape, const_map, pipeline_mode=pl.Buffered(1))

    out = pl.pallas_call(
        mlp_kernel,
        out_shape=jax.ShapeDtypeStruct((B, OUT_PAD), jnp.bfloat16),
        grid=grid,
        in_specs=[
            pl.BlockSpec((tm, IN_DIM), lambda i: (i, 0)),  # x tile streams per step (f32, K=784)
            resident_spec((IN_DIM, HID_PAD)),              # weights stay VMEM-resident
            resident_spec((1, HID_PAD)),
            resident_spec((HID_PAD, HID_PAD)),
            resident_spec((1, HID_PAD)),
            resident_spec((HID_PAD, OUT_PAD)),
            resident_spec((1, OUT_PAD)),
        ],
        out_specs=pl.BlockSpec((tm, OUT_PAD), lambda i: (i, 0)),
        compiler_params=pltpu.CompilerParams(
            dimension_semantics=("parallel",),     # batch axis: megacore sharding on v7x
            vmem_limit_bytes=32 * 1024 * 1024,     # tm=1024 footprint ~12 MiB; covers v5e default
        ),
    )(x, w1p, b1p, w2p, b2p, w3p, b3p)

    # strip lane padding; give the caller f32 logits
    return out[:, :OUT_DIM].astype(jnp.float32)


def init_linear_params(key, in_features, out_features):
    """Deterministic init mimicking PyTorch nn.Linear default (uniform +/- 1/sqrt(in))."""
    k_w, k_b = jax.random.split(key)
    bound = 1.0 / jnp.sqrt(jnp.float32(in_features))
    # PyTorch stores weight as (out, in); we keep (in, out) so the kernel does x @ W.
    w = jax.random.uniform(k_w, (in_features, out_features), jnp.float32, -bound, bound)
    b = jax.random.uniform(k_b, (1, out_features), jnp.float32, -bound, bound)
    return w, b


if __name__ == "__main__":
    key = jax.random.PRNGKey(0)
    k_x, k1, k2, k3 = jax.random.split(key, 4)

    batch = 8
    x = jax.random.normal(k_x, (batch, IN_DIM), jnp.float32)

    w1, b1 = init_linear_params(k1, IN_DIM, HID_DIM)
    w2, b2 = init_linear_params(k2, HID_DIM, HID_DIM)
    w3, b3 = init_linear_params(k3, HID_DIM, OUT_DIM)

    # One-time parameter prep (pad + bf16 cast), hoisted out of the per-call path.
    params = prepare_params(w1, b1, w2, b2, w3, b3)
    params = jax.block_until_ready(params)

    out = mlp_forward(x, *params)
    out = jax.block_until_ready(out)

    # Reference check against plain JAX (f32). Tolerance loosened for bf16 matmuls/output.
    ref = jnp.maximum(x @ w1 + b1, 0.0)
    ref = jnp.maximum(ref @ w2 + b2, 0.0)
    ref = jnp.maximum(ref @ w3 + b3, 0.0)
    assert out.shape == (batch, OUT_DIM)
    assert jnp.allclose(out, ref, atol=5e-2, rtol=5e-2), float(jnp.abs(out - ref).max())

    print("KERNEL_OK")
</pallas_src>

<mosaic_0001>
module attributes {stable_mosaic.version = 11 : i64} {
  func.func @mlp_kernel(%arg0: i32, %arg1: memref<16x784xf32, #tpu.memory_space<vmem>>, %arg2: memref<784x256xbf16, #tpu.memory_space<vmem>>, %arg3: memref<1x256xf32, #tpu.memory_space<vmem>>, %arg4: memref<256x256xbf16, #tpu.memory_space<vmem>>, %arg5: memref<1x256xf32, #tpu.memory_space<vmem>>, %arg6: memref<256x128xbf16, #tpu.memory_space<vmem>>, %arg7: memref<1x128xf32, #tpu.memory_space<vmem>>, %arg8: memref<16x128xbf16, #tpu.memory_space<vmem>>) attributes {dimension_semantics = [#tpu.dimension_semantics<parallel>], iteration_bounds = array<i64: 1>, scalar_prefetch = 0 : i64, scratch_operands = 0 : i64, tpu.core_type = #tpu.core_type<tc>, window_params = [{transform_indices = @transform_0, window_bounds = array<i64: 16, 784>}, {pipeline_mode = #tpu.pipeline_mode<synchronous>, transform_indices = @transform_1, window_bounds = array<i64: 784, 256>}, {pipeline_mode = #tpu.pipeline_mode<synchronous>, transform_indices = @transform_2, window_bounds = array<i64: 1, 256>}, {pipeline_mode = #tpu.pipeline_mode<synchronous>, transform_indices = @transform_3, window_bounds = array<i64: 256, 256>}, {pipeline_mode = #tpu.pipeline_mode<synchronous>, transform_indices = @transform_4, window_bounds = array<i64: 1, 256>}, {pipeline_mode = #tpu.pipeline_mode<synchronous>, transform_indices = @transform_5, window_bounds = array<i64: 256, 128>}, {pipeline_mode = #tpu.pipeline_mode<synchronous>, transform_indices = @transform_6, window_bounds = array<i64: 1, 128>}, {transform_indices = @transform_7, window_bounds = array<i64: 16, 128>}]} {
    %c0 = arith.constant 0 : index
    %c0_0 = arith.constant 0 : index
    %0 = vector.load %arg1[%c0, %c0_0] : memref<16x784xf32, #tpu.memory_space<vmem>>, vector<16x784xf32>
    %1 = arith.truncf %0 : vector<16x784xf32> to vector<16x784xbf16>
    %c0_1 = arith.constant 0 : index
    %c0_2 = arith.constant 0 : index
    %2 = vector.load %arg2[%c0_1, %c0_2] : memref<784x256xbf16, #tpu.memory_space<vmem>>, vector<784x256xbf16>
    %cst = arith.constant dense<0.000000e+00> : vector<16x256xf32>
    %3 = tpu.matmul %1, %2, %cst {dimension_numbers = #tpu.dot_dimension_numbers<[1], [0], [0], [1], [0, 0, 1, 1], [], []>} : vector<16x784xbf16>, vector<784x256xbf16>, vector<16x256xf32> -> vector<16x256xf32>
    %c0_3 = arith.constant 0 : index
    %c0_4 = arith.constant 0 : index
    %4 = vector.load %arg3[%c0_3, %c0_4] : memref<1x256xf32, #tpu.memory_space<vmem>>, vector<1x256xf32>
    %5 = vector.broadcast %4 : vector<1x256xf32> to vector<16x256xf32>
    %6 = arith.addf %3, %5 : vector<16x256xf32>
    %cst_5 = arith.constant 0.000000e+00 : f32
    %7 = vector.broadcast %cst_5 : f32 to vector<16x256xf32>
    %8 = arith.maximumf %6, %7 : vector<16x256xf32>
    %9 = arith.truncf %8 : vector<16x256xf32> to vector<16x256xbf16>
    %c0_6 = arith.constant 0 : index
    %c0_7 = arith.constant 0 : index
    %10 = vector.load %arg4[%c0_6, %c0_7] : memref<256x256xbf16, #tpu.memory_space<vmem>>, vector<256x256xbf16>
    %cst_8 = arith.constant dense<0.000000e+00> : vector<16x256xf32>
    %11 = tpu.matmul %9, %10, %cst_8 {dimension_numbers = #tpu.dot_dimension_numbers<[1], [0], [0], [1], [0, 0, 1, 1], [], []>} : vector<16x256xbf16>, vector<256x256xbf16>, vector<16x256xf32> -> vector<16x256xf32>
    %c0_9 = arith.constant 0 : index
    %c0_10 = arith.constant 0 : index
    %12 = vector.load %arg5[%c0_9, %c0_10] : memref<1x256xf32, #tpu.memory_space<vmem>>, vector<1x256xf32>
    %13 = vector.broadcast %12 : vector<1x256xf32> to vector<16x256xf32>
    %14 = arith.addf %11, %13 : vector<16x256xf32>
    %cst_11 = arith.constant 0.000000e+00 : f32
    %15 = vector.broadcast %cst_11 : f32 to vector<16x256xf32>
    %16 = arith.maximumf %14, %15 : vector<16x256xf32>
    %17 = arith.truncf %16 : vector<16x256xf32> to vector<16x256xbf16>
    %c0_12 = arith.constant 0 : index
    %c0_13 = arith.constant 0 : index
    %18 = vector.load %arg6[%c0_12, %c0_13] : memref<256x128xbf16, #tpu.memory_space<vmem>>, vector<256x128xbf16>
    %cst_14 = arith.constant dense<0.000000e+00> : vector<16x128xf32>
    %19 = tpu.matmul %17, %18, %cst_14 {dimension_numbers = #tpu.dot_dimension_numbers<[1], [0], [0], [1], [0, 0, 1, 1], [], []>} : vector<16x256xbf16>, vector<256x128xbf16>, vector<16x128xf32> -> vector<16x128xf32>
    %c0_15 = arith.constant 0 : index
    %c0_16 = arith.constant 0 : index
    %20 = vector.load %arg7[%c0_15, %c0_16] : memref<1x128xf32, #tpu.memory_space<vmem>>, vector<1x128xf32>
    %21 = vector.broadcast %20 : vector<1x128xf32> to vector<16x128xf32>
    %22 = arith.addf %19, %21 : vector<16x128xf32>
    %cst_17 = arith.constant 0.000000e+00 : f32
    %23 = vector.broadcast %cst_17 : f32 to vector<16x128xf32>
    %24 = arith.maximumf %22, %23 : vector<16x128xf32>
    %25 = arith.truncf %24 : vector<16x128xf32> to vector<16x128xbf16>
    %c0_18 = arith.constant 0 : index
    %c0_19 = arith.constant 0 : index
    %26 = vector.load %arg8[%c0_18, %c0_19] : memref<16x128xbf16, #tpu.memory_space<vmem>>, vector<16x128xbf16>
    tpu.vector_store %arg8[%c0_18, %c0_19], %25 {strides = array<i32>} : memref<16x128xbf16, #tpu.memory_space<vmem>>, vector<16x128xbf16>,
    return
  }
  func.func @transform_0(%arg0: i32) -> (i32, i32) {
    %c0_i32 = arith.constant 0 : i32
    %c0_i32_0 = arith.constant 0 : i32
    return %arg0, %c0_i32 : i32, i32
  }
  func.func @transform_1(%arg0: i32) -> (i32, i32) {
    %c0_i32 = arith.constant 0 : i32
    %c0_i32_0 = arith.constant 0 : i32
    %c0_i32_1 = arith.constant 0 : i32
    return %c0_i32, %c0_i32_0 : i32, i32
  }
  func.func @transform_2(%arg0: i32) -> (i32, i32) {
    %c0_i32 = arith.constant 0 : i32
    %c0_i32_0 = arith.constant 0 : i32
    %c0_i32_1 = arith.constant 0 : i32
    return %c0_i32, %c0_i32_0 : i32, i32
  }
  func.func @transform_3(%arg0: i32) -> (i32, i32) {
    %c0_i32 = arith.constant 0 : i32
    %c0_i32_0 = arith.constant 0 : i32
    %c0_i32_1 = arith.constant 0 : i32
    return %c0_i32, %c0_i32_0 : i32, i32
  }
  func.func @transform_4(%arg0: i32) -> (i32, i32) {
    %c0_i32 = arith.constant 0 : i32
    %c0_i32_0 = arith.constant 0 : i32
    %c0_i32_1 = arith.constant 0 : i32
    return %c0_i32, %c0_i32_0 : i32, i32
  }
  func.func @transform_5(%arg0: i32) -> (i32, i32) {
    %c0_i32 = arith.constant 0 : i32
    %c0_i32_0 = arith.constant 0 : i32
    %c0_i32_1 = arith.constant 0 : i32
    return %c0_i32, %c0_i32_0 : i32, i32
  }
  func.func @transform_6(%arg0: i32) -> (i32, i32) {
    %c0_i32 = arith.constant 0 : i32
    %c0_i32_0 = arith.constant 0 : i32
    %c0_i32_1 = arith.constant 0 : i32
    return %c0_i32, %c0_i32_0 : i32, i32
  }
  func.func @transform_7(%arg0: i32) -> (i32, i32) {
    %c0_i32 = arith.constant 0 : i32
    %c0_i32_0 = arith.constant 0 : i32
    return %arg0, %c0_i32 : i32, i32
  }
}

</mosaic_0001>

<llo_original>
// kernel: mlp_forward.1
$region0: #{mlp_forward.1}
  #allocation0 [shape = 'u32[]', space=smem, size = 0x4, offset = 0x4, fixed_abs, tag = 'smem constant byte address 0x4 - core index']
  #allocation1 [shape = 'u32[72,128]{1,0:T(1,128)}', space=vmem, size = 0x9000, scoped, tag = 'internal scratch']
  %s0 = inlined_call_operand.hbm [shape: f32[8,784], index: 0, kind: input, shape index: {}]
  %s1 = inlined_call_operand.hbm [shape: bf16[784,256], index: 1, kind: input, shape index: {}]
  %s2 = inlined_call_operand.hbm [shape: f32[1,256], index: 2, kind: input, shape index: {}]
  %s3 = inlined_call_operand.hbm [shape: bf16[256,256], index: 3, kind: input, shape index: {}]
  %s4 = inlined_call_operand.vmem [shape: f32[1,256], index: 4, kind: input, shape index: {}]
  %s5 = inlined_call_operand.hbm [shape: bf16[256,128], index: 5, kind: input, shape index: {}]
  %s6 = inlined_call_operand.vmem [shape: f32[1,128], index: 6, kind: input, shape index: {}]
  %s7 = inlined_call_operand.vmem [shape: bf16[8,128], index: 7, kind: output, shape index: {}]
  %s8 = sld [smem:[#allocation0]]
  $region88: #{mlp_forward.1} parent=0
    _
  %s10 = ssub.s32 1, %s8
  %s11 = scalar_select 0, %s10, %s8
  $region1: #{mlp_forward.1} parent=0
    #allocation2 [shape = 'u8[57344]{0}', space=vmem, size = 0xe000, scoped, tag = 'input window, operand 0, single buffered']
    #allocation3 [shape = 's32[1]{0}', space=sflag, size = 0x4, scoped, tag = 'scoped memory for mlp_forward.1']
    #allocation4 [shape = 'u8[401408]{0}', space=vmem, size = 0x62000, scoped, tag = 'input window, operand 1, single buffered']
    #allocation5 [shape = 's32[1]{0}', space=sflag, size = 0x4, scoped, tag = 'scoped memory for mlp_forward.1']
    #allocation6 [shape = 'u8[1024]{0}', space=vmem, size = 0x400, scoped, tag = 'input window, operand 2, single buffered']
    #allocation7 [shape = 'u8[131072]{0}', space=vmem, size = 0x20000, scoped, tag = 'input window, operand 3, single buffered']
    #allocation8 [shape = 's32[1]{0}', space=sflag, size = 0x4, scoped, tag = 'scoped memory for mlp_forward.1']
    #allocation9 [shape = 'u8[65536]{0}', space=vmem, size = 0x10000, scoped, tag = 'input window, operand 5, single buffered']
    #allocation10 [shape = 'u8[4096]{0}', space=vmem, size = 0x1000, scoped, tag = 'output window, operand 0, single buffered']
    %12 = vsyncpa [#allocation3], 0
    %13 = vsyncpa [#allocation5], 0
    %14 = vsyncpa [#allocation8], 0
    // Predicated region
    $region2: #{mlp_forward.1} parent=1 // pred_check
      _
    $region3: #{mlp_forward.1} parent=1 // pred_check_branch
      %16 = sbr.rel (0) target = $region5
    $region4: #{mlp_forward.1} parent=1 // pred_region
      %18 = vsyncadd [#allocation3], 896
      %s19 = sshll.u32 %s0, 4
      %s20 = int_to_ptr.hbm [resolvable:$true] %s19
      %s21 = sshll.u32 [#allocation2], 4
      %s22 = int_to_ptr.vmem [resolvable:$true] %s21
      %27 = dma.hbm_to_vmem [thread:$0]  %s20, 896, %s22, [#allocation3], 896, 896, 56
    $region5: #{mlp_forward.1} parent=1 // pred_fallthru
      _
    // Predicated region
    $region6: #{mlp_forward.1} parent=1 // pred_check
      _
    $region7: #{mlp_forward.1} parent=1 // pred_check_branch
      %29 = sbr.rel (0) target = $region9
    $region8: #{mlp_forward.1} parent=1 // pred_region
      %31 = vsyncadd [#allocation5], 0
      %s32 = sshll.u32 %s1, 4
      %s33 = int_to_ptr.hbm [resolvable:$true] %s32
      %s34 = sshll.u32 [#allocation4], 4
      %s35 = int_to_ptr.vmem [resolvable:$true] %s34
      %40 = dma.hbm_to_vmem [thread:$0]  %s33, 12544, %s35, [#allocation5], 128, 128, 8
    $region9: #{mlp_forward.1} parent=1 // pred_fallthru
      _
    // Predicated region
    $region10: #{mlp_forward.1} parent=1 // pred_check
      _
    $region11: #{mlp_forward.1} parent=1 // pred_check_branch
      %42 = sbr.rel (0) target = $region13
    $region12: #{mlp_forward.1} parent=1 // pred_region
      %44 = vsyncadd [#allocation5], 0
      %s46 = sshll.u32 %s2, 4
      %s47 = int_to_ptr.hbm [resolvable:$true] %s46
      %s48 = sshll.u32 [#allocation6], 4
      %s49 = int_to_ptr.vmem [resolvable:$true] %s48
      %51 = dma.hbm_to_vmem [thread:$0]  %s47, 32, %s49, [#allocation5]
    $region13: #{mlp_forward.1} parent=1 // pred_fallthru
      _
    // Predicated region
    $region14: #{mlp_forward.1} parent=1 // pred_check
      _
    $region15: #{mlp_forward.1} parent=1 // pred_check_branch
      %53 = sbr.rel (0) target = $region17
    $region16: #{mlp_forward.1} parent=1 // pred_region
      %55 = vsyncadd [#allocation8], 0
      %s56 = sshll.u32 %s3, 4
      %s57 = int_to_ptr.hbm [resolvable:$true] %s56
      %s58 = sshll.u32 [#allocation7], 4
      %s59 = int_to_ptr.vmem [resolvable:$true] %s58
      %64 = dma.hbm_to_vmem [thread:$0]  %s57, 4096, %s59, [#allocation8], 128, 128, 8
    $region17: #{mlp_forward.1} parent=1 // pred_fallthru
      _
    // Predicated region
    $region18: #{mlp_forward.1} parent=1 // pred_check
      _
    $region19: #{mlp_forward.1} parent=1 // pred_check_branch
      %66 = sbr.rel (0) target = $region21
    $region20: #{mlp_forward.1} parent=1 // pred_region
      _
    $region21: #{mlp_forward.1} parent=1 // pred_fallthru
      _
    // Predicated region
    $region22: #{mlp_forward.1} parent=1 // pred_check
      _
    $region23: #{mlp_forward.1} parent=1 // pred_check_branch
      %68 = sbr.rel (0) target = $region25
    $region24: #{mlp_forward.1} parent=1 // pred_region
      %70 = vsyncadd [#allocation8], 0
      %s71 = sshll.u32 %s5, 4
      %s72 = int_to_ptr.hbm [resolvable:$true] %s71
      %s73 = sshll.u32 [#allocation9], 4
      %s74 = int_to_ptr.vmem [resolvable:$true] %s73
      %79 = dma.hbm_to_vmem [thread:$0]  %s72, 2048, %s74, [#allocation8], 64, 64, 4
    $region25: #{mlp_forward.1} parent=1 // pred_fallthru
      _
    // Predicated region
    $region26: #{mlp_forward.1} parent=1 // pred_check
      _
    $region27: #{mlp_forward.1} parent=1 // pred_check_branch
      %81 = sbr.rel (0) target = $region29
    $region28: #{mlp_forward.1} parent=1 // pred_region
      _
    $region29: #{mlp_forward.1} parent=1 // pred_fallthru
      _
    // Predicated region
    $region30: #{mlp_forward.1} parent=1 // pred_check
      _
    $region31: #{mlp_forward.1} parent=1 // pred_check_branch
      %83 = sbr.rel (0) target = $region33
    $region32: #{mlp_forward.1} parent=1 // pred_region
      %85 = dma.done [#allocation3], 1792
    $region33: #{mlp_forward.1} parent=1 // pred_fallthru
      _
    // Predicated region
    $region34: #{mlp_forward.1} parent=1 // pred_check
      _
    $region35: #{mlp_forward.1} parent=1 // pred_check_branch
      %87 = sbr.rel (0) target = $region37
    $region36: #{mlp_forward.1} parent=1 // pred_region
      %89 = dma.done [#allocation5], 12544
    $region37: #{mlp_forward.1} parent=1 // pred_fallthru
      _
    // Predicated region
    $region38: #{mlp_forward.1} parent=1 // pred_check
      _
    $region39: #{mlp_forward.1} parent=1 // pred_check_branch
      %91 = sbr.rel (0) target = $region41
    $region40: #{mlp_forward.1} parent=1 // pred_region
      %93 = dma.done [#allocation5], 32
    $region41: #{mlp_forward.1} parent=1 // pred_fallthru
      _
    // Predicated region
    $region42: #{mlp_forward.1} parent=1 // pred_check
      _
    $region43: #{mlp_forward.1} parent=1 // pred_check_branch
      %95 = sbr.rel (0) target = $region45
    $region44: #{mlp_forward.1} parent=1 // pred_region
      %97 = dma.done [#allocation8], 4096
    $region45: #{mlp_forward.1} parent=1 // pred_fallthru
      _
    // Predicated region
    $region46: #{mlp_forward.1} parent=1 // pred_check
      _
    $region47: #{mlp_forward.1} parent=1 // pred_check_branch
      %99 = sbr.rel (0) target = $region49
    $region48: #{mlp_forward.1} parent=1 // pred_region
      %101 = dma.done [#allocation8], 2048
    $region49: #{mlp_forward.1} parent=1 // pred_fallthru
      _
    %v103 = vld [vmem:[#allocation2] sm:$0xff]
    %v104 = vld [vmem:[#allocation2 + $0x8] sm:$0xff]
    %v105 = vld [vmem:[#allocation2 + $0x10] sm:$0xff]
    %v106 = vld [vmem:[#allocation2 + $0x18] sm:$0xff]
    %v107 = vld [vmem:[#allocation2 + $0x20] sm:$0xff]
    %v108 = vld [vmem:[#allocation2 + $0x28] sm:$0xff]
    %v109 = vld [vmem:[#allocation2 + $0x30] sm:$0xff]
    %v110 = vld [vmem:[#allocation2 + $0x38] sm:$0xff]
    %v111 = vld [vmem:[#allocation2 + $0x40] sm:$0xff]
    %v112 = vld [vmem:[#allocation2 + $0x48] sm:$0xff]
    %v113 = vld [vmem:[#allocation2 + $0x50] sm:$0xff]
    %v114 = vld [vmem:[#allocation2 + $0x58] sm:$0xff]
    %v115 = vld [vmem:[#allocation2 + $0x60] sm:$0xff]
    %v116 = vld [vmem:[#allocation2 + $0x68] sm:$0xff]
    %v117 = vpack.c.bf16 %v110, %v103
    %v118 = vpack.c.bf16 %v111, %v104
    %v119 = vpack.c.bf16 %v112, %v105
    %v120 = vpack.c.bf16 %v113, %v106
    %v121 = vpack.c.bf16 %v114, %v107
    %v122 = vpack.c.bf16 %v115, %v108
    %v123 = vpack.c.bf16 %v116, %v109
    %v124 = vld [vmem:[#allocation4] sm:$0xff]
    %v125 = vld [vmem:[#allocation4 + $0x8] sm:$0xff]
    %v126 = vld [vmem:[#allocation4 + $0x10] sm:$0xff]
    %v127 = vld [vmem:[#allocation4 + $0x18] sm:$0xff]
    %v128 = vld [vmem:[#allocation4 + $0x20] sm:$0xff]
    %v129 = vld [vmem:[#allocation4 + $0x28] sm:$0xff]
    %v130 = vld [vmem:[#allocation4 + $0x30] sm:$0xff]
    %v131 = vld [vmem:[#allocation4 + $0x38] sm:$0xff]
    %v132 = vld [vmem:[#allocation4 + $0x40] sm:$0xff]
    %v133 = vld [vmem:[#allocation4 + $0x48] sm:$0xff]
    %v134 = vld [vmem:[#allocation4 + $0x50] sm:$0xff]
    %v135 = vld [vmem:[#allocation4 + $0x58] sm:$0xff]
    %v136 = vld [vmem:[#allocation4 + $0x60] sm:$0xff]
    %v137 = vld [vmem:[#allocation4 + $0x68] sm:$0xff]
    %v138 = vld [vmem:[#allocation4 + $0x70] sm:$0xff]
    %v139 = vld [vmem:[#allocation4 + $0x78] sm:$0xff]
    %v140 = vld [vmem:[#allocation4 + $0x80] sm:$0xff]
    %v141 = vld [vmem:[#allocation4 + $0x88] sm:$0xff]
    %v142 = vld [vmem:[#allocation4 + $0x90] sm:$0xff]
    %v143 = vld [vmem:[#allocation4 + $0x98] sm:$0xff]
    %v144 = vld [vmem:[#allocation4 + $0xa0] sm:$0xff]
    %v145 = vld [vmem:[#allocation4 + $0xa8] sm:$0xff]
    %v146 = vld [vmem:[#allocation4 + $0xb0] sm:$0xff]
    %v147 = vld [vmem:[#allocation4 + $0xb8] sm:$0xff]
    %v148 = vld [vmem:[#allocation4 + $0xc0] sm:$0xff]
    %v149 = vld [vmem:[#allocation4 + $0xc8] sm:$0xff]
    %v150 = vld [vmem:[#allocation4 + $0xd0] sm:$0xff]
    %v151 = vld [vmem:[#allocation4 + $0xd8] sm:$0xff]
    %v152 = vld [vmem:[#allocation4 + $0xe0] sm:$0xff]
    %v153 = vld [vmem:[#allocation4 + $0xe8] sm:$0xff]
    %v154 = vld [vmem:[#allocation4 + $0xf0] sm:$0xff]
    %v155 = vld [vmem:[#allocation4 + $0xf8] sm:$0xff]
    %v156 = vld [vmem:[#allocation4 + $0x100] sm:$0xff]
    %v157 = vld [vmem:[#allocation4 + $0x108] sm:$0xff]
    %v158 = vld [vmem:[#allocation4 + $0x110] sm:$0xff]
    %v159 = vld [vmem:[#allocation4 + $0x118] sm:$0xff]
    %v160 = vld [vmem:[#allocation4 + $0x120] sm:$0xff]
    %v161 = vld [vmem:[#allocation4 + $0x128] sm:$0xff]
    %v162 = vld [vmem:[#allocation4 + $0x130] sm:$0xff]
    %v163 = vld [vmem:[#allocation4 + $0x138] sm:$0xff]
    %v164 = vld [vmem:[#allocation4 + $0x140] sm:$0xff]
    %v165 = vld [vmem:[#allocation4 + $0x148] sm:$0xff]
    %v166 = vld [vmem:[#allocation4 + $0x150] sm:$0xff]
    %v167 = vld [vmem:[#allocation4 + $0x158] sm:$0xff]
    %v168 = vld [vmem:[#allocation4 + $0x160] sm:$0xff]
    %v169 = vld [vmem:[#allocation4 + $0x168] sm:$0xff]
    %v170 = vld [vmem:[#allocation4 + $0x170] sm:$0xff]
    %v171 = vld [vmem:[#allocation4 + $0x178] sm:$0xff]
    %v172 = vld [vmem:[#allocation4 + $0x180] sm:$0xff]
    %v173 = vld [vmem:[#allocation4 + $0x188] sm:$0xff]
    %v174 = vld [vmem:[#allocation4 + $0x190] sm:$0xff]
    %v175 = vld [vmem:[#allocation4 + $0x198] sm:$0xff]
    %v176 = vld [vmem:[#allocation4 + $0x1a0] sm:$0xff]
    %v177 = vld [vmem:[#allocation4 + $0x1a8] sm:$0xff]
    %v178 = vld [vmem:[#allocation4 + $0x1b0] sm:$0xff]
    %v179 = vld [vmem:[#allocation4 + $0x1b8] sm:$0xff]
    %v180 = vld [vmem:[#allocation4 + $0x1c0] sm:$0xff]
    %v181 = vld [vmem:[#allocation4 + $0x1c8] sm:$0xff]
    %v182 = vld [vmem:[#allocation4 + $0x1d0] sm:$0xff]
    %v183 = vld [vmem:[#allocation4 + $0x1d8] sm:$0xff]
    %v184 = vld [vmem:[#allocation4 + $0x1e0] sm:$0xff]
    %v185 = vld [vmem:[#allocation4 + $0x1e8] sm:$0xff]
    %v186 = vld [vmem:[#allocation4 + $0x1f0] sm:$0xff]
    %v187 = vld [vmem:[#allocation4 + $0x1f8] sm:$0xff]
    %v188 = vld [vmem:[#allocation4 + $0x200] sm:$0xff]
    %v189 = vld [vmem:[#allocation4 + $0x208] sm:$0xff]
    %v190 = vld [vmem:[#allocation4 + $0x210] sm:$0xff]
    %v191 = vld [vmem:[#allocation4 + $0x218] sm:$0xff]
    %v192 = vld [vmem:[#allocation4 + $0x220] sm:$0xff]
    %v193 = vld [vmem:[#allocation4 + $0x228] sm:$0xff]
    %v194 = vld [vmem:[#allocation4 + $0x230] sm:$0xff]
    %v195 = vld [vmem:[#allocation4 + $0x238] sm:$0xff]
    %v196 = vld [vmem:[#allocation4 + $0x240] sm:$0xff]
    %v197 = vld [vmem:[#allocation4 + $0x248] sm:$0xff]
    %v198 = vld [vmem:[#allocation4 + $0x250] sm:$0xff]
    %v199 = vld [vmem:[#allocation4 + $0x258] sm:$0xff]
    %v200 = vld [vmem:[#allocation4 + $0x260] sm:$0xff]
    %v201 = vld [vmem:[#allocation4 + $0x268] sm:$0xff]
    %v202 = vld [vmem:[#allocation4 + $0x270] sm:$0xff]
    %v203 = vld [vmem:[#allocation4 + $0x278] sm:$0xff]
    %v204 = vld [vmem:[#allocation4 + $0x280] sm:$0xff]
    %v205 = vld [vmem:[#allocation4 + $0x288] sm:$0xff]
    %v206 = vld [vmem:[#allocation4 + $0x290] sm:$0xff]
    %v207 = vld [vmem:[#allocation4 + $0x298] sm:$0xff]
    %v208 = vld [vmem:[#allocation4 + $0x2a0] sm:$0xff]
    %v209 = vld [vmem:[#allocation4 + $0x2a8] sm:$0xff]
    %v210 = vld [vmem:[#allocation4 + $0x2b0] sm:$0xff]
    %v211 = vld [vmem:[#allocation4 + $0x2b8] sm:$0xff]
    %v212 = vld [vmem:[#allocation4 + $0x2c0] sm:$0xff]
    %v213 = vld [vmem:[#allocation4 + $0x2c8] sm:$0xff]
    %v214 = vld [vmem:[#allocation4 + $0x2d0] sm:$0xff]
    %v215 = vld [vmem:[#allocation4 + $0x2d8] sm:$0xff]
    %v216 = vld [vmem:[#allocation4 + $0x2e0] sm:$0xff]
    %v217 = vld [vmem:[#allocation4 + $0x2e8] sm:$0xff]
    %v218 = vld [vmem:[#allocation4 + $0x2f0] sm:$0xff]
    %v219 = vld [vmem:[#allocation4 + $0x2f8] sm:$0xff]
    %v220 = vld [vmem:[#allocation4 + $0x300] sm:$0xff]
    %v221 = vld [vmem:[#allocation4 + $0x308] sm:$0xff]
    %v222 = vld [vmem:[#allocation6] sm:$0x3]
    %v224 = vperm.slane %v222, 0
    %v225 = vperm.slane %v222, 1
    %v326 = vunpack.c.l.b16 %v124
    %v327 = vunpack.c.h.b16 %v124
    %v328 = vunpack.c.l.b16 %v125
    %v329 = vunpack.c.h.b16 %v125
    %v330 = vunpack.c.l.b16 %v126
    %v331 = vunpack.c.h.b16 %v126
    %v332 = vunpack.c.l.b16 %v127
    %v333 = vunpack.c.h.b16 %v127
    %v334 = vunpack.c.l.b16 %v128
    %v335 = vunpack.c.h.b16 %v128
    %v336 = vunpack.c.l.b16 %v129
    %v337 = vunpack.c.h.b16 %v129
    %v338 = vunpack.c.l.b16 %v130
    %v339 = vunpack.c.h.b16 %v130
    %v340 = vunpack.c.l.b16 %v131
    %v341 = vunpack.c.h.b16 %v131
    %v342 = vunpack.c.l.b16 %v132
    %v343 = vunpack.c.h.b16 %v132
    %v344 = vunpack.c.l.b16 %v133
    %v345 = vunpack.c.h.b16 %v133
    %v346 = vunpack.c.l.b16 %v134
    %v347 = vunpack.c.h.b16 %v134
    %v348 = vunpack.c.l.b16 %v135
    %v349 = vunpack.c.h.b16 %v135
    %v350 = vunpack.c.l.b16 %v136
    %v351 = vunpack.c.h.b16 %v136
    %v352 = vunpack.c.l.b16 %v137
    %v353 = vunpack.c.h.b16 %v137
    %v354 = vunpack.c.l.b16 %v138
    %v355 = vunpack.c.h.b16 %v138
    %v356 = vunpack.c.l.b16 %v139
    %v357 = vunpack.c.h.b16 %v139
    %v358 = vunpack.c.l.b16 %v140
    %v359 = vunpack.c.h.b16 %v140
    %v360 = vunpack.c.l.b16 %v141
    %v361 = vunpack.c.h.b16 %v141
    %v362 = vunpack.c.l.b16 %v142
    %v363 = vunpack.c.h.b16 %v142
    %v364 = vunpack.c.l.b16 %v143
    %v365 = vunpack.c.h.b16 %v143
    %v366 = vunpack.c.l.b16 %v144
    %v367 = vunpack.c.h.b16 %v144
    %v368 = vunpack.c.l.b16 %v145
    %v369 = vunpack.c.h.b16 %v145
    %v370 = vunpack.c.l.b16 %v146
    %v371 = vunpack.c.h.b16 %v146
    %v372 = vunpack.c.l.b16 %v147
    %v373 = vunpack.c.h.b16 %v147
    %v374 = vunpack.c.l.b16 %v148
    %v375 = vunpack.c.h.b16 %v148
    %v376 = vunpack.c.l.b16 %v149
    %v377 = vunpack.c.h.b16 %v149
    %v378 = vunpack.c.l.b16 %v150
    %v379 = vunpack.c.h.b16 %v150
    %v380 = vunpack.c.l.b16 %v151
    %v381 = vunpack.c.h.b16 %v151
    %v382 = vunpack.c.l.b16 %v152
    %v383 = vunpack.c.h.b16 %v152
    %v384 = vunpack.c.l.b16 %v153
    %v385 = vunpack.c.h.b16 %v153
    %v386 = vunpack.c.l.b16 %v154
    %v387 = vunpack.c.h.b16 %v154
    %v388 = vunpack.c.l.b16 %v155
    %v389 = vunpack.c.h.b16 %v155
    %v390 = vunpack.c.l.b16 %v156
    %v391 = vunpack.c.h.b16 %v156
    %v392 = vunpack.c.l.b16 %v157
    %v393 = vunpack.c.h.b16 %v157
    %v394 = vunpack.c.l.b16 %v158
    %v395 = vunpack.c.h.b16 %v158
    %v396 = vunpack.c.l.b16 %v159
    %v397 = vunpack.c.h.b16 %v159
    %v398 = vunpack.c.l.b16 %v160
    %v399 = vunpack.c.h.b16 %v160
    %v400 = vunpack.c.l.b16 %v161
    %v401 = vunpack.c.h.b16 %v161
    %v402 = vunpack.c.l.b16 %v162
    %v403 = vunpack.c.h.b16 %v162
    %v404 = vunpack.c.l.b16 %v163
    %v405 = vunpack.c.h.b16 %v163
    %v406 = vunpack.c.l.b16 %v164
    %v407 = vunpack.c.h.b16 %v164
    %v408 = vunpack.c.l.b16 %v165
    %v409 = vunpack.c.h.b16 %v165
    %v410 = vunpack.c.l.b16 %v166
    %v411 = vunpack.c.h.b16 %v166
    %v412 = vunpack.c.l.b16 %v167
    %v413 = vunpack.c.h.b16 %v167
    %v414 = vunpack.c.l.b16 %v168
    %v415 = vunpack.c.h.b16 %v168
    %v416 = vunpack.c.l.b16 %v169
    %v417 = vunpack.c.h.b16 %v169
    %v418 = vunpack.c.l.b16 %v170
    %v419 = vunpack.c.h.b16 %v170
    %v420 = vunpack.c.l.b16 %v171
    %v421 = vunpack.c.h.b16 %v171
    %v422 = vunpack.c.l.b16 %v172
    %v423 = vunpack.c.h.b16 %v172
    %v424 = vunpack.c.l.b16 %v173
    %v425 = vunpack.c.h.b16 %v173
    %v426 = vunpack.c.l.b16 %v174
    %v427 = vunpack.c.h.b16 %v174
    %v428 = vunpack.c.l.b16 %v175
    %v429 = vunpack.c.h.b16 %v175
    %v430 = vunpack.c.l.b16 %v176
    %v431 = vunpack.c.h.b16 %v176
    %v432 = vunpack.c.l.b16 %v177
    %v433 = vunpack.c.h.b16 %v177
    %v434 = vunpack.c.l.b16 %v178
    %v435 = vunpack.c.h.b16 %v178
    %v436 = vunpack.c.l.b16 %v179
    %v437 = vunpack.c.h.b16 %v179
    %v438 = vunpack.c.l.b16 %v180
    %v439 = vunpack.c.h.b16 %v180
    %v440 = vunpack.c.l.b16 %v181
    %v441 = vunpack.c.h.b16 %v181
    %v442 = vunpack.c.l.b16 %v182
    %v443 = vunpack.c.h.b16 %v182
    %v444 = vunpack.c.l.b16 %v183
    %v445 = vunpack.c.h.b16 %v183
    %v446 = vunpack.c.l.b16 %v184
    %v447 = vunpack.c.h.b16 %v184
    %v448 = vunpack.c.l.b16 %v185
    %v449 = vunpack.c.h.b16 %v185
    %v450 = vunpack.c.l.b16 %v186
    %v451 = vunpack.c.h.b16 %v186
    %v452 = vunpack.c.l.b16 %v187
    %v453 = vunpack.c.h.b16 %v187
    %v454 = vunpack.c.l.b16 %v188
    %v455 = vunpack.c.h.b16 %v188
    %v456 = vunpack.c.l.b16 %v189
    %v457 = vunpack.c.h.b16 %v189
    %v458 = vunpack.c.l.b16 %v190
    %v459 = vunpack.c.h.b16 %v190
    %v460 = vunpack.c.l.b16 %v191
    %v461 = vunpack.c.h.b16 %v191
    %v462 = vunpack.c.l.b16 %v192
    %v463 = vunpack.c.h.b16 %v192
    %v464 = vunpack.c.l.b16 %v193
    %v465 = vunpack.c.h.b16 %v193
    %v466 = vunpack.c.l.b16 %v194
    %v467 = vunpack.c.h.b16 %v194
    %v468 = vunpack.c.l.b16 %v195
    %v469 = vunpack.c.h.b16 %v195
    %v470 = vunpack.c.l.b16 %v196
    %v471 = vunpack.c.h.b16 %v196
    %v472 = vunpack.c.l.b16 %v197
    %v473 = vunpack.c.h.b16 %v197
    %v474 = vunpack.c.l.b16 %v198
    %v475 = vunpack.c.h.b16 %v198
    %v476 = vunpack.c.l.b16 %v199
    %v477 = vunpack.c.h.b16 %v199
    %v478 = vunpack.c.l.b16 %v200
    %v479 = vunpack.c.h.b16 %v200
    %v480 = vunpack.c.l.b16 %v201
    %v481 = vunpack.c.h.b16 %v201
    %v482 = vunpack.c.l.b16 %v202
    %v483 = vunpack.c.h.b16 %v202
    %v484 = vunpack.c.l.b16 %v203
    %v485 = vunpack.c.h.b16 %v203
    %v486 = vunpack.c.l.b16 %v204
    %v487 = vunpack.c.h.b16 %v204
    %v488 = vunpack.c.l.b16 %v205
    %v489 = vunpack.c.h.b16 %v205
    %v490 = vunpack.c.l.b16 %v206
    %v491 = vunpack.c.h.b16 %v206
    %v492 = vunpack.c.l.b16 %v207
    %v493 = vunpack.c.h.b16 %v207
    %v494 = vunpack.c.l.b16 %v208
    %v495 = vunpack.c.h.b16 %v208
    %v496 = vunpack.c.l.b16 %v209
    %v497 = vunpack.c.h.b16 %v209
    %v498 = vunpack.c.l.b16 %v210
    %v499 = vunpack.c.h.b16 %v210
    %v500 = vunpack.c.l.b16 %v211
    %v501 = vunpack.c.h.b16 %v211
    %v502 = vunpack.c.l.b16 %v212
    %v503 = vunpack.c.h.b16 %v212
    %v504 = vunpack.c.l.b16 %v213
    %v505 = vunpack.c.h.b16 %v213
    %v506 = vunpack.c.l.b16 %v214
    %v507 = vunpack.c.h.b16 %v214
    %v508 = vunpack.c.l.b16 %v215
    %v509 = vunpack.c.h.b16 %v215
    %v510 = vunpack.c.l.b16 %v216
    %v511 = vunpack.c.h.b16 %v216
    %v512 = vunpack.c.l.b16 %v217
    %v513 = vunpack.c.h.b16 %v217
    %v514 = vunpack.c.l.b16 %v218
    %v515 = vunpack.c.h.b16 %v218
    %v516 = vunpack.c.l.b16 %v219
    %v517 = vunpack.c.h.b16 %v219
    %v518 = vunpack.c.l.b16 %v220
    %v519 = vunpack.c.h.b16 %v220
    %v520 = vunpack.c.l.b16 %v221
    %v521 = vunpack.c.h.b16 %v221
    %v522 = vpack.c.b16 %v328, %v326
    %v523 = vpack.c.b16 %v329, %v327
    %v524 = vpack.c.b16 %v332, %v330
    %v525 = vpack.c.b16 %v333, %v331
    %v526 = vpack.c.b16 %v336, %v334
    %v527 = vpack.c.b16 %v337, %v335
    %v528 = vpack.c.b16 %v340, %v338
    %v529 = vpack.c.b16 %v341, %v339
    %v530 = vpack.c.b16 %v344, %v342
    %v531 = vpack.c.b16 %v345, %v343
    %v532 = vpack.c.b16 %v348, %v346
    %v533 = vpack.c.b16 %v349, %v347
    %v534 = vpack.c.b16 %v352, %v350
    %v535 = vpack.c.b16 %v353, %v351
    %v536 = vpack.c.b16 %v356, %v354
    %v537 = vpack.c.b16 %v357, %v355
    %v538 = vpack.c.b16 %v360, %v358
    %v539 = vpack.c.b16 %v361, %v359
    %v540 = vpack.c.b16 %v364, %v362
    %v541 = vpack.c.b16 %v365, %v363
    %v542 = vpack.c.b16 %v368, %v366
    %v543 = vpack.c.b16 %v369, %v367
    %v544 = vpack.c.b16 %v372, %v370
    %v545 = vpack.c.b16 %v373, %v371
    %v546 = vpack.c.b16 %v376, %v374
    %v547 = vpack.c.b16 %v377, %v375
    %v548 = vpack.c.b16 %v380, %v378
    %v549 = vpack.c.b16 %v381, %v379
    %v550 = vpack.c.b16 %v384, %v382
    %v551 = vpack.c.b16 %v385, %v383
    %v552 = vpack.c.b16 %v388, %v386
    %v553 = vpack.c.b16 %v389, %v387
    %v554 = vpack.c.b16 %v392, %v390
    %v555 = vpack.c.b16 %v393, %v391
    %v556 = vpack.c.b16 %v396, %v394
    %v557 = vpack.c.b16 %v397, %v395
    %v558 = vpack.c.b16 %v400, %v398
    %v559 = vpack.c.b16 %v401, %v399
    %v560 = vpack.c.b16 %v404, %v402
    %v561 = vpack.c.b16 %v405, %v403
    %v562 = vpack.c.b16 %v408, %v406
    %v563 = vpack.c.b16 %v409, %v407
    %v564 = vpack.c.b16 %v412, %v410
    %v565 = vpack.c.b16 %v413, %v411
    %v566 = vpack.c.b16 %v416, %v414
    %v567 = vpack.c.b16 %v417, %v415
    %v568 = vpack.c.b16 %v420, %v418
    %v569 = vpack.c.b16 %v421, %v419
    %v570 = vpack.c.b16 %v424, %v422
    %v571 = vpack.c.b16 %v425, %v423
    %v572 = vpack.c.b16 %v428, %v426
    %v573 = vpack.c.b16 %v429, %v427
    %v574 = vpack.c.b16 %v432, %v430
    %v575 = vpack.c.b16 %v433, %v431
    %v576 = vpack.c.b16 %v436, %v434
    %v577 = vpack.c.b16 %v437, %v435
    %v578 = vpack.c.b16 %v440, %v438
    %v579 = vpack.c.b16 %v441, %v439
    %v580 = vpack.c.b16 %v444, %v442
    %v581 = vpack.c.b16 %v445, %v443
    %v582 = vpack.c.b16 %v448, %v446
    %v583 = vpack.c.b16 %v449, %v447
    %v584 = vpack.c.b16 %v452, %v450
    %v585 = vpack.c.b16 %v453, %v451
    %v586 = vpack.c.b16 %v456, %v454
    %v587 = vpack.c.b16 %v457, %v455
    %v588 = vpack.c.b16 %v460, %v458
    %v589 = vpack.c.b16 %v461, %v459
    %v590 = vpack.c.b16 %v464, %v462
    %v591 = vpack.c.b16 %v465, %v463
    %v592 = vpack.c.b16 %v468, %v466
    %v593 = vpack.c.b16 %v469, %v467
    %v594 = vpack.c.b16 %v472, %v470
    %v595 = vpack.c.b16 %v473, %v471
    %v596 = vpack.c.b16 %v476, %v474
    %v597 = vpack.c.b16 %v477, %v475
    %v598 = vpack.c.b16 %v480, %v478
    %v599 = vpack.c.b16 %v481, %v479
    %v600 = vpack.c.b16 %v484, %v482
    %v601 = vpack.c.b16 %v485, %v483
    %v602 = vpack.c.b16 %v488, %v486
    %v603 = vpack.c.b16 %v489, %v487
    %v604 = vpack.c.b16 %v492, %v490
    %v605 = vpack.c.b16 %v493, %v491
    %v606 = vpack.c.b16 %v496, %v494
    %v607 = vpack.c.b16 %v497, %v495
    %v608 = vpack.c.b16 %v500, %v498
    %v609 = vpack.c.b16 %v501, %v499
    %v610 = vpack.c.b16 %v504, %v502
    %v611 = vpack.c.b16 %v505, %v503
    %v612 = vpack.c.b16 %v508, %v506
    %v613 = vpack.c.b16 %v509, %v507
    %v614 = vpack.c.b16 %v512, %v510
    %v615 = vpack.c.b16 %v513, %v511
    %v616 = vpack.c.b16 %v516, %v514
    %v617 = vpack.c.b16 %v517, %v515
    %v618 = vpack.c.b16 %v520, %v518
    %v619 = vpack.c.b16 %v521, %v519
    %vm718 = vcmask 130048
    %v720 = vsel %vm718, %v123, 0
    %722 = vmatpush.bf16.msra.mxu0 %v536
    %723 = vmatpush.bf16.msra.mxu0 %v534
    %724 = vmatpush.bf16.msra.mxu0 %v532
    %725 = vmatpush.bf16.msra.mxu0 %v530
    %726 = vmatpush.bf16.msra.mxu0 %v528
    %727 = vmatpush.bf16.msra.mxu0 %v526
    %728 = vmatpush.bf16.msra.mxu0 %v524
    %729 = vmatpush.bf16.msra.mxu0 %v522
    %730 = vmatmul.bf16.gmra.mxu0 %v117
    %v731 = vpop.f32.mrf.mxu0
    %v732 = vadd.f32 %v224, %v731
    %v733 = vpop.f32.mrf.mxu0
    %v734 = vadd.f32 %v224, %v733
    %735 = vdwg.mxu0
    %736 = vmatpush.bf16.msra.mxu0 %v552
    %737 = vmatpush.bf16.msra.mxu0 %v550
    %738 = vmatpush.bf16.msra.mxu0 %v548
    %739 = vmatpush.bf16.msra.mxu0 %v546
    %740 = vmatpush.bf16.msra.mxu0 %v544
    %741 = vmatpush.bf16.msra.mxu0 %v542
    %742 = vmatpush.bf16.msra.mxu0 %v540
    %743 = vmatpush.bf16.msra.mxu0 %v538
    %744 = vmatmul.bf16.gmra.mxu0 %v118
    %v745 = vpop.f32.mrf.mxu0
    %v746 = vadd.f32 %v732, %v745
    %v747 = vpop.f32.mrf.mxu0
    %v748 = vadd.f32 %v734, %v747
    %749 = vdwg.mxu0
    %750 = vmatpush.bf16.msra.mxu0 %v568
    %751 = vmatpush.bf16.msra.mxu0 %v566
    %752 = vmatpush.bf16.msra.mxu0 %v564
    %753 = vmatpush.bf16.msra.mxu0 %v562
    %754 = vmatpush.bf16.msra.mxu0 %v560
    %755 = vmatpush.bf16.msra.mxu0 %v558
    %756 = vmatpush.bf16.msra.mxu0 %v556
    %757 = vmatpush.bf16.msra.mxu0 %v554
    %758 = vmatmul.bf16.gmra.mxu0 %v119
    %v759 = vpop.f32.mrf.mxu0
    %v760 = vadd.f32 %v746, %v759
    %v761 = vpop.f32.mrf.mxu0
    %v762 = vadd.f32 %v748, %v761
    %763 = vdwg.mxu0
    %764 = vmatpush.bf16.msra.mxu0 %v584
    %765 = vmatpush.bf16.msra.mxu0 %v582
    %766 = vmatpush.bf16.msra.mxu0 %v580
    %767 = vmatpush.bf16.msra.mxu0 %v578
    %768 = vmatpush.bf16.msra.mxu0 %v576
    %769 = vmatpush.bf16.msra.mxu0 %v574
    %770 = vmatpush.bf16.msra.mxu0 %v572
    %771 = vmatpush.bf16.msra.mxu0 %v570
    %772 = vmatmul.bf16.gmra.mxu0 %v120
    %v773 = vpop.f32.mrf.mxu0
    %v774 = vadd.f32 %v760, %v773
    %v775 = vpop.f32.mrf.mxu0
    %v776 = vadd.f32 %v762, %v775
    %777 = vdwg.mxu0
    %778 = vmatpush.bf16.msra.mxu0 %v600
    %779 = vmatpush.bf16.msra.mxu0 %v598
    %780 = vmatpush.bf16.msra.mxu0 %v596
    %781 = vmatpush.bf16.msra.mxu0 %v594
    %782 = vmatpush.bf16.msra.mxu0 %v592
    %783 = vmatpush.bf16.msra.mxu0 %v590
    %784 = vmatpush.bf16.msra.mxu0 %v588
    %785 = vmatpush.bf16.msra.mxu0 %v586
    %786 = vmatmul.bf16.gmra.mxu0 %v121
    %v787 = vpop.f32.mrf.mxu0
    %v788 = vadd.f32 %v774, %v787
    %v789 = vpop.f32.mrf.mxu0
    %v790 = vadd.f32 %v776, %v789
    %791 = vdwg.mxu0
    %792 = vmatpush.bf16.msra.mxu0 %v616
    %793 = vmatpush.bf16.msra.mxu0 %v614
    %794 = vmatpush.bf16.msra.mxu0 %v612
    %795 = vmatpush.bf16.msra.mxu0 %v610
    %796 = vmatpush.bf16.msra.mxu0 %v608
    %797 = vmatpush.bf16.msra.mxu0 %v606
    %798 = vmatpush.bf16.msra.mxu0 %v604
    %799 = vmatpush.bf16.msra.mxu0 %v602
    %800 = vmatmul.bf16.gmra.mxu0 %v122
    %v801 = vpop.f32.mrf.mxu0
    %v802 = vadd.f32 %v788, %v801
    %v803 = vpop.f32.mrf.mxu0
    %v804 = vadd.f32 %v790, %v803
    %805 = vdwg.mxu0
    %806 = vmatpush.bf16.msra.mxu0 0
    %807 = vmatpush.bf16.msra.mxu0 0
    %808 = vmatpush.bf16.msra.mxu0 0
    %809 = vmatpush.bf16.msra.mxu0 0
    %810 = vmatpush.bf16.msra.mxu0 0
    %811 = vmatpush.bf16.msra.mxu0 0
    %812 = vmatpush.bf16.msra.mxu0 0
    %813 = vmatpush.bf16.msra.mxu0 %v618
    %814 = vmatmul.bf16.gmra.mxu0 %v720
    %v815 = vpop.f32.mrf.mxu0
    %v816 = vadd.f32 %v802, %v815
    %v817 = vpop.f32.mrf.mxu0
    %v818 = vadd.f32 %v804, %v817
    %819 = vdwg.mxu0
    %820 = vmatpush.bf16.msra.mxu0 %v537
    %821 = vmatpush.bf16.msra.mxu0 %v535
    %822 = vmatpush.bf16.msra.mxu0 %v533
    %823 = vmatpush.bf16.msra.mxu0 %v531
    %824 = vmatpush.bf16.msra.mxu0 %v529
    %825 = vmatpush.bf16.msra.mxu0 %v527
    %826 = vmatpush.bf16.msra.mxu0 %v525
    %827 = vmatpush.bf16.msra.mxu0 %v523
    %828 = vmatmul.bf16.gmra.mxu0 %v117
    %v829 = vpop.f32.mrf.mxu0
    %v830 = vadd.f32 %v225, %v829
    %v831 = vpop.f32.mrf.mxu0
    %v832 = vadd.f32 %v225, %v831
    %833 = vdwg.mxu0
    %834 = vmatpush.bf16.msra.mxu0 %v553
    %835 = vmatpush.bf16.msra.mxu0 %v551
    %836 = vmatpush.bf16.msra.mxu0 %v549
    %837 = vmatpush.bf16.msra.mxu0 %v547
    %838 = vmatpush.bf16.msra.mxu0 %v545
    %839 = vmatpush.bf16.msra.mxu0 %v543
    %840 = vmatpush.bf16.msra.mxu0 %v541
    %841 = vmatpush.bf16.msra.mxu0 %v539
    %842 = vmatmul.bf16.gmra.mxu0 %v118
    %v843 = vpop.f32.mrf.mxu0
    %v844 = vadd.f32 %v830, %v843
    %v845 = vpop.f32.mrf.mxu0
    %v846 = vadd.f32 %v832, %v845
    %847 = vdwg.mxu0
    %848 = vmatpush.bf16.msra.mxu0 %v569
    %849 = vmatpush.bf16.msra.mxu0 %v567
    %850 = vmatpush.bf16.msra.mxu0 %v565
    %851 = vmatpush.bf16.msra.mxu0 %v563
    %852 = vmatpush.bf16.msra.mxu0 %v561
    %853 = vmatpush.bf16.msra.mxu0 %v559
    %854 = vmatpush.bf16.msra.mxu0 %v557
    %855 = vmatpush.bf16.msra.mxu0 %v555
    %856 = vmatmul.bf16.gmra.mxu0 %v119
    %v857 = vpop.f32.mrf.mxu0
    %v858 = vadd.f32 %v844, %v857
    %v859 = vpop.f32.mrf.mxu0
    %v860 = vadd.f32 %v846, %v859
    %861 = vdwg.mxu0
    %862 = vmatpush.bf16.msra.mxu0 %v585
    %863 = vmatpush.bf16.msra.mxu0 %v583
    %864 = vmatpush.bf16.msra.mxu0 %v581
    %865 = vmatpush.bf16.msra.mxu0 %v579
    %866 = vmatpush.bf16.msra.mxu0 %v577
    %867 = vmatpush.bf16.msra.mxu0 %v575
    %868 = vmatpush.bf16.msra.mxu0 %v573
    %869 = vmatpush.bf16.msra.mxu0 %v571
    %870 = vmatmul.bf16.gmra.mxu0 %v120
    %v871 = vpop.f32.mrf.mxu0
    %v872 = vadd.f32 %v858, %v871
    %v873 = vpop.f32.mrf.mxu0
    %v874 = vadd.f32 %v860, %v873
    %875 = vdwg.mxu0
    %876 = vmatpush.bf16.msra.mxu0 %v601
    %877 = vmatpush.bf16.msra.mxu0 %v599
    %878 = vmatpush.bf16.msra.mxu0 %v597
    %879 = vmatpush.bf16.msra.mxu0 %v595
    %880 = vmatpush.bf16.msra.mxu0 %v593
    %881 = vmatpush.bf16.msra.mxu0 %v591
    %882 = vmatpush.bf16.msra.mxu0 %v589
    %883 = vmatpush.bf16.msra.mxu0 %v587
    %884 = vmatmul.bf16.gmra.mxu0 %v121
    %v885 = vpop.f32.mrf.mxu0
    %v886 = vadd.f32 %v872, %v885
    %v887 = vpop.f32.mrf.mxu0
    %v888 = vadd.f32 %v874, %v887
    %889 = vdwg.mxu0
    %890 = vmatpush.bf16.msra.mxu0 %v617
    %891 = vmatpush.bf16.msra.mxu0 %v615
    %892 = vmatpush.bf16.msra.mxu0 %v613
    %893 = vmatpush.bf16.msra.mxu0 %v611
    %894 = vmatpush.bf16.msra.mxu0 %v609
    %895 = vmatpush.bf16.msra.mxu0 %v607
    %896 = vmatpush.bf16.msra.mxu0 %v605
    %897 = vmatpush.bf16.msra.mxu0 %v603
    %898 = vmatmul.bf16.gmra.mxu0 %v122
    %v899 = vpop.f32.mrf.mxu0
    %v900 = vadd.f32 %v886, %v899
    %v901 = vpop.f32.mrf.mxu0
    %v902 = vadd.f32 %v888, %v901
    %903 = vdwg.mxu0
    %904 = vmatpush.bf16.msra.mxu0 0
    %905 = vmatpush.bf16.msra.mxu0 0
    %906 = vmatpush.bf16.msra.mxu0 0
    %907 = vmatpush.bf16.msra.mxu0 0
    %908 = vmatpush.bf16.msra.mxu0 0
    %909 = vmatpush.bf16.msra.mxu0 0
    %910 = vmatpush.bf16.msra.mxu0 0
    %911 = vmatpush.bf16.msra.mxu0 %v619
    %912 = vmatmul.bf16.gmra.mxu0 %v720
    %v913 = vpop.f32.mrf.mxu0
    %v914 = vadd.f32 %v900, %v913
    %v915 = vpop.f32.mrf.mxu0
    %v916 = vadd.f32 %v902, %v915
    %917 = vdwg.mxu0
    %v918 = vmax.f32 %v816, 0.0
    %v919 = vmax.f32 %v914, 0.0
    %v920 = vmax.f32 %v818, 0.0
    %v921 = vmax.f32 %v916, 0.0
    %v922 = vpack.c.bf16 %v920, %v918
    %v923 = vpack.c.bf16 %v921, %v919
    %v924 = vld [vmem:[#allocation7] sm:$0xff]
    %v925 = vld [vmem:[#allocation7 + $0x8] sm:$0xff]
    %v926 = vld [vmem:[#allocation7 + $0x10] sm:$0xff]
    %v927 = vld [vmem:[#allocation7 + $0x18] sm:$0xff]
    %v928 = vld [vmem:[#allocation7 + $0x20] sm:$0xff]
    %v929 = vld [vmem:[#allocation7 + $0x28] sm:$0xff]
    %v930 = vld [vmem:[#allocation7 + $0x30] sm:$0xff]
    %v931 = vld [vmem:[#allocation7 + $0x38] sm:$0xff]
    %v932 = vld [vmem:[#allocation7 + $0x40] sm:$0xff]
    %v933 = vld [vmem:[#allocation7 + $0x48] sm:$0xff]
    %v934 = vld [vmem:[#allocation7 + $0x50] sm:$0xff]
    %v935 = vld [vmem:[#allocation7 + $0x58] sm:$0xff]
    %v936 = vld [vmem:[#allocation7 + $0x60] sm:$0xff]
    %v937 = vld [vmem:[#allocation7 + $0x68] sm:$0xff]
    %v938 = vld [vmem:[#allocation7 + $0x70] sm:$0xff]
    %v939 = vld [vmem:[#allocation7 + $0x78] sm:$0xff]
    %v940 = vld [vmem:[#allocation7 + $0x80] sm:$0xff]
    %v941 = vld [vmem:[#allocation7 + $0x88] sm:$0xff]
    %v942 = vld [vmem:[#allocation7 + $0x90] sm:$0xff]
    %v943 = vld [vmem:[#allocation7 + $0x98] sm:$0xff]
    %v944 = vld [vmem:[#allocation7 + $0xa0] sm:$0xff]
    %v945 = vld [vmem:[#allocation7 + $0xa8] sm:$0xff]
    %v946 = vld [vmem:[#allocation7 + $0xb0] sm:$0xff]
    %v947 = vld [vmem:[#allocation7 + $0xb8] sm:$0xff]
    %v948 = vld [vmem:[#allocation7 + $0xc0] sm:$0xff]
    %v949 = vld [vmem:[#allocation7 + $0xc8] sm:$0xff]
    %v950 = vld [vmem:[#allocation7 + $0xd0] sm:$0xff]
    %v951 = vld [vmem:[#allocation7 + $0xd8] sm:$0xff]
    %v952 = vld [vmem:[#allocation7 + $0xe0] sm:$0xff]
    %v953 = vld [vmem:[#allocation7 + $0xe8] sm:$0xff]
    %v954 = vld [vmem:[#allocation7 + $0xf0] sm:$0xff]
    %v955 = vld [vmem:[#allocation7 + $0xf8] sm:$0xff]
    %v956 = vld [vmem:[%s4] sm:$0x3]
    %v958 = vperm.slane %v956, 0
    %v959 = vperm.slane %v956, 1
    %v994 = vunpack.c.l.b16 %v924
    %v995 = vunpack.c.h.b16 %v924
    %v996 = vunpack.c.l.b16 %v925
    %v997 = vunpack.c.h.b16 %v925
    %v998 = vunpack.c.l.b16 %v926
    %v999 = vunpack.c.h.b16 %v926
    %v1000 = vunpack.c.l.b16 %v927
    %v1001 = vunpack.c.h.b16 %v927
    %v1002 = vunpack.c.l.b16 %v928
    %v1003 = vunpack.c.h.b16 %v928
    %v1004 = vunpack.c.l.b16 %v929
    %v1005 = vunpack.c.h.b16 %v929
    %v1006 = vunpack.c.l.b16 %v930
    %v1007 = vunpack.c.h.b16 %v930
    %v1008 = vunpack.c.l.b16 %v931
    %v1009 = vunpack.c.h.b16 %v931
    %v1010 = vunpack.c.l.b16 %v932
    %v1011 = vunpack.c.h.b16 %v932
    %v1012 = vunpack.c.l.b16 %v933
    %v1013 = vunpack.c.h.b16 %v933
    %v1014 = vunpack.c.l.b16 %v934
    %v1015 = vunpack.c.h.b16 %v934
    %v1016 = vunpack.c.l.b16 %v935
    %v1017 = vunpack.c.h.b16 %v935
    %v1018 = vunpack.c.l.b16 %v936
    %v1019 = vunpack.c.h.b16 %v936
    %v1020 = vunpack.c.l.b16 %v937
    %v1021 = vunpack.c.h.b16 %v937
    %v1022 = vunpack.c.l.b16 %v938
    %v1023 = vunpack.c.h.b16 %v938
    %v1024 = vunpack.c.l.b16 %v939
    %v1025 = vunpack.c.h.b16 %v939
    %v1026 = vunpack.c.l.b16 %v940
    %v1027 = vunpack.c.h.b16 %v940
    %v1028 = vunpack.c.l.b16 %v941
    %v1029 = vunpack.c.h.b16 %v941
    %v1030 = vunpack.c.l.b16 %v942
    %v1031 = vunpack.c.h.b16 %v942
    %v1032 = vunpack.c.l.b16 %v943
    %v1033 = vunpack.c.h.b16 %v943
    %v1034 = vunpack.c.l.b16 %v944
    %v1035 = vunpack.c.h.b16 %v944
    %v1036 = vunpack.c.l.b16 %v945
    %v1037 = vunpack.c.h.b16 %v945
    %v1038 = vunpack.c.l.b16 %v946
    %v1039 = vunpack.c.h.b16 %v946
    %v1040 = vunpack.c.l.b16 %v947
    %v1041 = vunpack.c.h.b16 %v947
    %v1042 = vunpack.c.l.b16 %v948
    %v1043 = vunpack.c.h.b16 %v948
    %v1044 = vunpack.c.l.b16 %v949
    %v1045 = vunpack.c.h.b16 %v949
    %v1046 = vunpack.c.l.b16 %v950
    %v1047 = vunpack.c.h.b16 %v950
    %v1048 = vunpack.c.l.b16 %v951
    %v1049 = vunpack.c.h.b16 %v951
    %v1050 = vunpack.c.l.b16 %v952
    %v1051 = vunpack.c.h.b16 %v952
    %v1052 = vunpack.c.l.b16 %v953
    %v1053 = vunpack.c.h.b16 %v953
    %v1054 = vunpack.c.l.b16 %v954
    %v1055 = vunpack.c.h.b16 %v954
    %v1056 = vunpack.c.l.b16 %v955
    %v1057 = vunpack.c.h.b16 %v955
    %v1058 = vpack.c.b16 %v996, %v994
    %v1059 = vpack.c.b16 %v997, %v995
    %v1060 = vpack.c.b16 %v1000, %v998
    %v1061 = vpack.c.b16 %v1001, %v999
    %v1062 = vpack.c.b16 %v1004, %v1002
    %v1063 = vpack.c.b16 %v1005, %v1003
    %v1064 = vpack.c.b16 %v1008, %v1006
    %v1065 = vpack.c.b16 %v1009, %v1007
    %v1066 = vpack.c.b16 %v1012, %v1010
    %v1067 = vpack.c.b16 %v1013, %v1011
    %v1068 = vpack.c.b16 %v1016, %v1014
    %v1069 = vpack.c.b16 %v1017, %v1015
    %v1070 = vpack.c.b16 %v1020, %v1018
    %v1071 = vpack.c.b16 %v1021, %v1019
    %v1072 = vpack.c.b16 %v1024, %v1022
    %v1073 = vpack.c.b16 %v1025, %v1023
    %v1074 = vpack.c.b16 %v1028, %v1026
    %v1075 = vpack.c.b16 %v1029, %v1027
    %v1076 = vpack.c.b16 %v1032, %v1030
    %v1077 = vpack.c.b16 %v1033, %v1031
    %v1078 = vpack.c.b16 %v1036, %v1034
    %v1079 = vpack.c.b16 %v1037, %v1035
    %v1080 = vpack.c.b16 %v1040, %v1038
    %v1081 = vpack.c.b16 %v1041, %v1039
    %v1082 = vpack.c.b16 %v1044, %v1042
    %v1083 = vpack.c.b16 %v1045, %v1043
    %v1084 = vpack.c.b16 %v1048, %v1046
    %v1085 = vpack.c.b16 %v1049, %v1047
    %v1086 = vpack.c.b16 %v1052, %v1050
    %v1087 = vpack.c.b16 %v1053, %v1051
    %v1088 = vpack.c.b16 %v1056, %v1054
    %v1089 = vpack.c.b16 %v1057, %v1055
    %1122 = vmatpush.bf16.msra.mxu0 %v1072
    %1123 = vmatpush.bf16.msra.mxu0 %v1070
    %1124 = vmatpush.bf16.msra.mxu0 %v1068
    %1125 = vmatpush.bf16.msra.mxu0 %v1066
    %1126 = vmatpush.bf16.msra.mxu0 %v1064
    %1127 = vmatpush.bf16.msra.mxu0 %v1062
    %1128 = vmatpush.bf16.msra.mxu0 %v1060
    %1129 = vmatpush.bf16.msra.mxu0 %v1058
    %1130 = vmatmul.bf16.gmra.mxu0 %v922
    %v1131 = vpop.f32.mrf.mxu0
    %v1132 = vadd.f32 %v958, %v1131
    %v1133 = vpop.f32.mrf.mxu0
    %v1134 = vadd.f32 %v958, %v1133
    %1135 = vdwg.mxu0
    %1136 = vmatpush.bf16.msra.mxu0 %v1088
    %1137 = vmatpush.bf16.msra.mxu0 %v1086
    %1138 = vmatpush.bf16.msra.mxu0 %v1084
    %1139 = vmatpush.bf16.msra.mxu0 %v1082
    %1140 = vmatpush.bf16.msra.mxu0 %v1080
    %1141 = vmatpush.bf16.msra.mxu0 %v1078
    %1142 = vmatpush.bf16.msra.mxu0 %v1076
    %1143 = vmatpush.bf16.msra.mxu0 %v1074
    %1144 = vmatmul.bf16.gmra.mxu0 %v923
    %v1145 = vpop.f32.mrf.mxu0
    %v1146 = vadd.f32 %v1132, %v1145
    %v1147 = vpop.f32.mrf.mxu0
    %v1148 = vadd.f32 %v1134, %v1147
    %1149 = vdwg.mxu0
    %1150 = vmatpush.bf16.msra.mxu0 %v1073
    %1151 = vmatpush.bf16.msra.mxu0 %v1071
    %1152 = vmatpush.bf16.msra.mxu0 %v1069
    %1153 = vmatpush.bf16.msra.mxu0 %v1067
    %1154 = vmatpush.bf16.msra.mxu0 %v1065
    %1155 = vmatpush.bf16.msra.mxu0 %v1063
    %1156 = vmatpush.bf16.msra.mxu0 %v1061
    %1157 = vmatpush.bf16.msra.mxu0 %v1059
    %1158 = vmatmul.bf16.gmra.mxu0 %v922
    %v1159 = vpop.f32.mrf.mxu0
    %v1160 = vadd.f32 %v959, %v1159
    %v1161 = vpop.f32.mrf.mxu0
    %v1162 = vadd.f32 %v959, %v1161
    %1163 = vdwg.mxu0
    %1164 = vmatpush.bf16.msra.mxu0 %v1089
    %1165 = vmatpush.bf16.msra.mxu0 %v1087
    %1166 = vmatpush.bf16.msra.mxu0 %v1085
    %1167 = vmatpush.bf16.msra.mxu0 %v1083
    %1168 = vmatpush.bf16.msra.mxu0 %v1081
    %1169 = vmatpush.bf16.msra.mxu0 %v1079
    %1170 = vmatpush.bf16.msra.mxu0 %v1077
    %1171 = vmatpush.bf16.msra.mxu0 %v1075
    %1172 = vmatmul.bf16.gmra.mxu0 %v923
    %v1173 = vpop.f32.mrf.mxu0
    %v1174 = vadd.f32 %v1160, %v1173
    %v1175 = vpop.f32.mrf.mxu0
    %v1176 = vadd.f32 %v1162, %v1175
    %1177 = vdwg.mxu0
    %v1178 = vmax.f32 %v1146, 0.0
    %v1179 = vmax.f32 %v1174, 0.0
    %v1180 = vmax.f32 %v1148, 0.0
    %v1181 = vmax.f32 %v1176, 0.0
    %v1182 = vpack.c.bf16 %v1180, %v1178
    %v1183 = vpack.c.bf16 %v1181, %v1179
    %v1184 = vld [vmem:[#allocation9] sm:$0xf]
    %v1185 = vld [vmem:[#allocation9 + $0x4] sm:$0xf]
    %v1186 = vld [vmem:[#allocation9 + $0x8] sm:$0xf]
    %v1187 = vld [vmem:[#allocation9 + $0xc] sm:$0xf]
    %v1188 = vld [vmem:[#allocation9 + $0x10] sm:$0xf]
    %v1189 = vld [vmem:[#allocation9 + $0x14] sm:$0xf]
    %v1190 = vld [vmem:[#allocation9 + $0x18] sm:$0xf]
    %v1191 = vld [vmem:[#allocation9 + $0x1c] sm:$0xf]
    %v1192 = vld [vmem:[#allocation9 + $0x20] sm:$0xf]
    %v1193 = vld [vmem:[#allocation9 + $0x24] sm:$0xf]
    %v1194 = vld [vmem:[#allocation9 + $0x28] sm:$0xf]
    %v1195 = vld [vmem:[#allocation9 + $0x2c] sm:$0xf]
    %v1196 = vld [vmem:[#allocation9 + $0x30] sm:$0xf]
    %v1197 = vld [vmem:[#allocation9 + $0x34] sm:$0xf]
    %v1198 = vld [vmem:[#allocation9 + $0x38] sm:$0xf]
    %v1199 = vld [vmem:[#allocation9 + $0x3c] sm:$0xf]
    %v1200 = vld [vmem:[#allocation9 + $0x40] sm:$0xf]
    %v1201 = vld [vmem:[#allocation9 + $0x44] sm:$0xf]
    %v1202 = vld [vmem:[#allocation9 + $0x48] sm:$0xf]
    %v1203 = vld [vmem:[#allocation9 + $0x4c] sm:$0xf]
    %v1204 = vld [vmem:[#allocation9 + $0x50] sm:$0xf]
    %v1205 = vld [vmem:[#allocation9 + $0x54] sm:$0xf]
    %v1206 = vld [vmem:[#allocation9 + $0x58] sm:$0xf]
    %v1207 = vld [vmem:[#allocation9 + $0x5c] sm:$0xf]
    %v1208 = vld [vmem:[#allocation9 + $0x60] sm:$0xf]
    %v1209 = vld [vmem:[#allocation9 + $0x64] sm:$0xf]
    %v1210 = vld [vmem:[#allocation9 + $0x68] sm:$0xf]
    %v1211 = vld [vmem:[#allocation9 + $0x6c] sm:$0xf]
    %v1212 = vld [vmem:[#allocation9 + $0x70] sm:$0xf]
    %v1213 = vld [vmem:[#allocation9 + $0x74] sm:$0xf]
    %v1214 = vld [vmem:[#allocation9 + $0x78] sm:$0xf]
    %v1215 = vld [vmem:[#allocation9 + $0x7c] sm:$0xf]
    %v1216 = vld [vmem:[%s6] sm:$0x1]
    %v1218 = vperm.slane %v1216, 0
    %v1252 = vunpack.c.l.b16 %v1184
    %v1253 = vunpack.c.l.b16 %v1185
    %v1254 = vunpack.c.l.b16 %v1186
    %v1255 = vunpack.c.l.b16 %v1187
    %v1256 = vunpack.c.l.b16 %v1188
    %v1257 = vunpack.c.l.b16 %v1189
    %v1258 = vunpack.c.l.b16 %v1190
    %v1259 = vunpack.c.l.b16 %v1191
    %v1260 = vunpack.c.l.b16 %v1192
    %v1261 = vunpack.c.l.b16 %v1193
    %v1262 = vunpack.c.l.b16 %v1194
    %v1263 = vunpack.c.l.b16 %v1195
    %v1264 = vunpack.c.l.b16 %v1196
    %v1265 = vunpack.c.l.b16 %v1197
    %v1266 = vunpack.c.l.b16 %v1198
    %v1267 = vunpack.c.l.b16 %v1199
    %v1268 = vunpack.c.l.b16 %v1200
    %v1269 = vunpack.c.l.b16 %v1201
    %v1270 = vunpack.c.l.b16 %v1202
    %v1271 = vunpack.c.l.b16 %v1203
    %v1272 = vunpack.c.l.b16 %v1204
    %v1273 = vunpack.c.l.b16 %v1205
    %v1274 = vunpack.c.l.b16 %v1206
    %v1275 = vunpack.c.l.b16 %v1207
    %v1276 = vunpack.c.l.b16 %v1208
    %v1277 = vunpack.c.l.b16 %v1209
    %v1278 = vunpack.c.l.b16 %v1210
    %v1279 = vunpack.c.l.b16 %v1211
    %v1280 = vunpack.c.l.b16 %v1212
    %v1281 = vunpack.c.l.b16 %v1213
    %v1282 = vunpack.c.l.b16 %v1214
    %v1283 = vunpack.c.l.b16 %v1215
    %v1284 = vpack.c.b16 %v1253, %v1252
    %v1285 = vpack.c.b16 %v1255, %v1254
    %v1286 = vpack.c.b16 %v1257, %v1256
    %v1287 = vpack.c.b16 %v1259, %v1258
    %v1288 = vpack.c.b16 %v1261, %v1260
    %v1289 = vpack.c.b16 %v1263, %v1262
    %v1290 = vpack.c.b16 %v1265, %v1264
    %v1291 = vpack.c.b16 %v1267, %v1266
    %v1292 = vpack.c.b16 %v1269, %v1268
    %v1293 = vpack.c.b16 %v1271, %v1270
    %v1294 = vpack.c.b16 %v1273, %v1272
    %v1295 = vpack.c.b16 %v1275, %v1274
    %v1296 = vpack.c.b16 %v1277, %v1276
    %v1297 = vpack.c.b16 %v1279, %v1278
    %v1298 = vpack.c.b16 %v1281, %v1280
    %v1299 = vpack.c.b16 %v1283, %v1282
    %1316 = vmatpush.bf16.msra.mxu0 %v1291
    %1317 = vmatpush.bf16.msra.mxu0 %v1290
    %1318 = vmatpush.bf16.msra.mxu0 %v1289
    %1319 = vmatpush.bf16.msra.mxu0 %v1288
    %1320 = vmatpush.bf16.msra.mxu0 %v1287
    %1321 = vmatpush.bf16.msra.mxu0 %v1286
    %1322 = vmatpush.bf16.msra.mxu0 %v1285
    %1323 = vmatpush.bf16.msra.mxu0 %v1284
    %1324 = vmatmul.bf16.gmra.mxu0 %v1182
    %v1325 = vpop.f32.mrf.mxu0
    %v1326 = vadd.f32 %v1218, %v1325
    %v1327 = vpop.f32.mrf.mxu0
    %v1328 = vadd.f32 %v1218, %v1327
    %1329 = vdwg.mxu0
    %1330 = vmatpush.bf16.msra.mxu0 %v1299
    %1331 = vmatpush.bf16.msra.mxu0 %v1298
    %1332 = vmatpush.bf16.msra.mxu0 %v1297
    %1333 = vmatpush.bf16.msra.mxu0 %v1296
    %1334 = vmatpush.bf16.msra.mxu0 %v1295
    %1335 = vmatpush.bf16.msra.mxu0 %v1294
    %1336 = vmatpush.bf16.msra.mxu0 %v1293
    %1337 = vmatpush.bf16.msra.mxu0 %v1292
    %1338 = vmatmul.bf16.gmra.mxu0 %v1183
    %v1339 = vpop.f32.mrf.mxu0
    %v1340 = vadd.f32 %v1326, %v1339
    %v1341 = vpop.f32.mrf.mxu0
    %v1342 = vadd.f32 %v1328, %v1341
    %1343 = vdwg.mxu0
    %v1344 = vmax.f32 %v1340, 0.0
    %v1345 = vmax.f32 %v1342, 0.0
    %v1346 = vpack.c.bf16 %v1344, %v1344
    %v1347 = vpack.c.bf16 %v1345, %v1345
    %1348 = vst [vmem:[#allocation10] sm:$0xf] %v1346
    %1349 = vst [vmem:[#allocation10 + $0x4] sm:$0xf] %v1347
    // Predicated region
    $region50: #{mlp_forward.1} parent=1 // pred_check
      _
    $region51: #{mlp_forward.1} parent=1 // pred_check_branch
      %1351 = sbr.rel (0) target = $region53
    $region52: #{mlp_forward.1} parent=1 // pred_region
      // Predicated region
      $region54: #{mlp_forward.1} parent=52 // pred_check
        _
      $region55: #{mlp_forward.1} parent=52 // pred_check_branch
        %1353 = sbr.rel (0) target = $region57
      $region56: #{mlp_forward.1} parent=52 // pred_region
        // Predicated region
        $region58: #{mlp_forward.1} parent=56 // pred_check
          _
        $region59: #{mlp_forward.1} parent=56 // pred_check_branch
          %1355 = sbr.rel target = $region61
        $region60: #{mlp_forward.1} parent=56 // pred_region
          // Predicated region
          $region73: #{mlp_forward.1} parent=60 // pred_check
            _
          $region74: #{mlp_forward.1} parent=60 // pred_check_branch
            %1371 = sbr.rel (0) target = $region76
          $region75: #{mlp_forward.1} parent=60 // pred_region
            %s1373 = ssub.s32 16, 1
            loop: start=0, step=1, limit=1
            $region77: #{mlp_forward.1} parent=75 // loop_pre_header
              _
            $region78: #{mlp_forward.1} parent=75 // loop_header
              %s1375 = sphi 0, %s1379
              %p1376 = scmp.ge.s32.totalorder %s1375, 1
              %s1380 = sphi [#allocation10], [#allocation10]
              %s1381 = sphi %s7, %s7
            $region79: #{mlp_forward.1} parent=75 // loop_header_branch
              %1378 = sbr.rel (%p1376) target = $region83
            $region80: #{mlp_forward.1} parent=75 // loop_body
              %v1382 = vld [vmem:[%s1380] sm:%s1373]
              %1383 = vst [vmem:[%s1381] sm:%s1373] %v1382
            $region81: #{mlp_forward.1} parent=75 // loop_footer
              %s1379 = sadd.s32 1, %s1375
            $region82: #{mlp_forward.1} parent=75 // loop_footer_branch
              %1374 = sbr.rel target = $region78
            $region83: #{mlp_forward.1} parent=75 // loop_exit
              _
          $region76: #{mlp_forward.1} parent=60 // pred_fallthru
            _
        $region61: #{mlp_forward.1} parent=56 // pred_fallthru
          _
        // Predicated region
        $region62: #{mlp_forward.1} parent=56 // pred_check
          _
        $region63: #{mlp_forward.1} parent=56 // pred_check_branch
          %1357 = sbr.rel (0) target = $region65
        $region64: #{mlp_forward.1} parent=56 // pred_region
          %s1359 = ssub.s32 16, 1
          loop: start=0, step=1, limit=1
          $region66: #{mlp_forward.1} parent=64 // loop_pre_header
            _
          $region67: #{mlp_forward.1} parent=64 // loop_header
            %s1361 = sphi 0, %s1365
            %p1362 = scmp.ge.s32.totalorder %s1361, 1
            %s1366 = sphi [#allocation10], [#allocation10]
            %s1367 = sphi %s7, %s7
          $region68: #{mlp_forward.1} parent=64 // loop_header_branch
            %1364 = sbr.rel (%p1362) target = $region72
          $region69: #{mlp_forward.1} parent=64 // loop_body
            %v1368 = vld [vmem:[%s1366] sm:%s1359]
            %1369 = vst [vmem:[%s1367] sm:%s1359] %v1368
          $region70: #{mlp_forward.1} parent=64 // loop_footer
            %s1365 = sadd.s32 1, %s1361
          $region71: #{mlp_forward.1} parent=64 // loop_footer_branch
            %1360 = sbr.rel target = $region67
          $region72: #{mlp_forward.1} parent=64 // loop_exit
            _
        $region65: #{mlp_forward.1} parent=56 // pred_fallthru
          _
      $region57: #{mlp_forward.1} parent=52 // pred_fallthru
        _
      %1384 = vnop
    $region53: #{mlp_forward.1} parent=1 // pred_fallthru
      _
    // Predicated region
    $region84: #{mlp_forward.1} parent=1 // pred_check
      _
    $region85: #{mlp_forward.1} parent=1 // pred_check_branch
      %1386 = sbr.rel (0) target = $region87
    $region86: #{mlp_forward.1} parent=1 // pred_region
      _
    $region87: #{mlp_forward.1} parent=1 // pred_fallthru
      _
    %1387 = vsyncpa [#allocation3], 1
    %1388 = vsyncpa [#allocation5], 1
    %1389 = vsyncpa [#allocation8], 1

</llo_original>
